<compile_context>
chip_gen: v6e
topology: v6e:2x2x1
jax: 0.10.0
libtpu: 0.0.40
codegen_flags: <defaults>
</compile_context>

<pallas_src>
import jax
import jax.numpy as jnp
from jax.experimental import pallas as pl
from jax.experimental.pallas import tpu as pltpu

# Small, self-consistent hyperparameters (mirroring the module's globals).
EMBEDDING_SIZE = 32
NUM_FILTERS = 16
NUM_CLASSES = 4
WINDOW_SIZES = (1, 2, 3, 5, 10)
VOCAB_SIZE = 64
SEQ_LEN = 8           # tokens per review
BATCH = 2

_NW = len(WINDOW_SIZES)
_MAX_WS = max(WINDOW_SIZES)               # 10-tap shared frame
_MAX_PAD = _MAX_WS - 1                    # conv padding of the largest window
_PADDED_OUT = 128                         # lane-dense feature / logit width
_SEG = 24                                 # per-batch im2col rows (>=17, mult of 8)
_LEAD_PAD = 16                            # zero rows before/after tokens (8-aligned store)
_FRAME_OFF = _LEAD_PAD - _MAX_PAD         # frame t, tap k reads y[_FRAME_OFF + t + k]
_BT = BATCH * SEQ_LEN

# y (per-batch zero-padded sequence) must cover every tap of every frame row.
assert 2 * _LEAD_PAD + SEQ_LEN >= _FRAME_OFF + (_MAX_WS - 1) + _SEG
assert _SEG % 8 == 0 and _SEG >= SEQ_LEN + _MAX_WS - 1
assert _NW * NUM_FILTERS <= _PADDED_OUT


# ---------------------------------------------------------------------------
# Fused Pallas kernel: one-hot embedding gather + fused 5-window conv matmul
# + masked max-pool + (hoisted) bias/relu6 + FC, all in one invocation.
# ---------------------------------------------------------------------------
def _textcnn_kernel(ids_ref, emb_ref, convw_ref, convb_ref, mask_ref,
                    fcw_ref, fcb_ref, out_ref):
    """
    ids_ref   : [B*T, 1]        int32  token ids (column vector)
    emb_ref   : [V, E]          f32    embedding table
    convw_ref : [10*E, 128]     f32    packed conv weights (all windows, lane groups)
    convb_ref : [1, 128]        f32    conv biases (window-major lanes, rest 0)
    mask_ref  : [B*SEG, 128]    f32    0 where (window, t) valid, -1e30 elsewhere
    fcw_ref   : [128, 128]      f32    FC weights (window-major rows, padded)
    fcb_ref   : [1, 128]        f32    FC bias (padded)
    out_ref   : [B, 128]        f32    logits (cols >= NUM_CLASSES are garbage/0)
    """
    V, E = emb_ref.shape

    # ---- embedding lookup as a one-hot MXU matmul (no scalar-indexed loads) ----
    ids = ids_ref[...]                                              # [B*T, 1] i32
    col = jax.lax.broadcasted_iota(jnp.int32, (_BT, V), 1)
    onehot = (col == ids).astype(jnp.float32)                       # [B*T, V]
    emb_rows = jnp.dot(onehot, emb_ref[...],
                       preferred_element_type=jnp.float32)          # [B*T, E]

    # ---- shared 10-tap im2col, batch segments 8-row aligned -------------------
    zpad = jnp.zeros((_LEAD_PAD, E), jnp.float32)
    lhs_parts = []
    for b in range(BATCH):
        # tokens land at rows [16, 24) -> aligned; y has 40 rows total.
        y = jnp.concatenate(
            [zpad, emb_rows[b * SEQ_LEN:(b + 1) * SEQ_LEN, :], zpad], axis=0)
        cols = [y[_FRAME_OFF + k:_FRAME_OFF + k + _SEG, :] for k in range(_MAX_WS)]
        lhs_parts.append(jnp.concatenate(cols, axis=1))             # [SEG, 10*E]
    lhs = jnp.concatenate(lhs_parts, axis=0)                        # [B*SEG, 10*E]

    # ---- all five window convolutions in ONE lane-dense matmul ----------------
    conv = jnp.dot(lhs, convw_ref[...],
                   preferred_element_type=jnp.float32)              # [B*SEG, 128]
    conv = conv + mask_ref[...]          # -1e30 at (window, t) pairs that are invalid

    # ---- global max-pool per batch segment (8-aligned slices) -----------------
    pooled = jnp.concatenate(
        [jnp.max(conv[b * _SEG:(b + 1) * _SEG, :], axis=0, keepdims=True)
         for b in range(BATCH)], axis=0)                            # [B, 128]

    # ---- bias + relu6 hoisted past the max-pool (monotone => exact) -----------
    act = jnp.clip(pooled + convb_ref[...], 0.0, 6.0)               # [B, 128]

    # ---- FC (lane-dense output) ------------------------------------------------
    out_ref[...] = (jnp.dot(act, fcw_ref[...],
                            preferred_element_type=jnp.float32)
                    + fcb_ref[...])


# ---------------------------------------------------------------------------
# Wrapper
# ---------------------------------------------------------------------------
@jax.jit
def cnn_forward(token_ids, packed):
    ids_col = token_ids.reshape(-1, 1).astype(jnp.int32)            # [B*T, 1]
    out = pl.pallas_call(
        _textcnn_kernel,
        out_shape=jax.ShapeDtypeStruct((BATCH, _PADDED_OUT), jnp.float32),
        in_specs=[pl.BlockSpec(memory_space=pltpu.MemorySpace.VMEM)] * 7,
        out_specs=pl.BlockSpec(memory_space=pltpu.MemorySpace.VMEM),
    )(ids_col, packed["embedding"], packed["conv_w"], packed["conv_b"],
      packed["mask"], packed["fc_w"], packed["fc_b"])
    return out[:, :NUM_CLASSES]


# ---------------------------------------------------------------------------
# Parameter packing
# ---------------------------------------------------------------------------
def init_params(key):
    """Deterministic synthetic parameters in PyTorch layout + kernel-packed layout."""
    # TODO(synk): the pretrained gensim word2vec table (and its padding_idx) is
    # replaced by a synthetic embedding; padding_idx only affects gradients in
    # PyTorch, so the forward pass is a plain table lookup either way.
    keys = iter(jax.random.split(key, 16))

    def rnd(shape):
        return jax.random.normal(next(keys), shape, dtype=jnp.float32) * 0.1

    raw = {
        "embedding": rnd((VOCAB_SIZE, EMBEDDING_SIZE)),
        "conv_w": [rnd((NUM_FILTERS, ws, EMBEDDING_SIZE)) for ws in WINDOW_SIZES],
        "conv_b": [rnd((NUM_FILTERS,)) for _ in WINDOW_SIZES],
        # nn.Linear weight transposed: rows indexed filter-major (f*NW + w),
        # matching PyTorch's cat(dim=2).view() flatten order.
        "fc_w": rnd((NUM_FILTERS * _NW, NUM_CLASSES)),
        "fc_b": rnd((NUM_CLASSES,)),
    }

    # --- fused conv weights: window w occupies the LAST ws taps of the 10-tap
    # frame (rows [(10-ws)*E, 10*E)) and lane group [w*NF, (w+1)*NF). ---
    conv_w_packed = jnp.zeros((_MAX_WS * EMBEDDING_SIZE, _PADDED_OUT), jnp.float32)
    for w, ws in enumerate(WINDOW_SIZES):
        w_flat = raw["conv_w"][w].reshape(NUM_FILTERS, ws * EMBEDDING_SIZE).T  # [ws*E, NF]
        row0 = (_MAX_WS - ws) * EMBEDDING_SIZE
        conv_w_packed = conv_w_packed.at[
            row0:row0 + ws * EMBEDDING_SIZE,
            w * NUM_FILTERS:(w + 1) * NUM_FILTERS].set(w_flat)

    conv_b_packed = jnp.zeros((1, _PADDED_OUT), jnp.float32)
    conv_b_packed = conv_b_packed.at[0, :_NW * NUM_FILTERS].set(
        jnp.concatenate(raw["conv_b"]))

    # --- additive max-pool mask: window w is valid at frame rows t < T+ws-1 ---
    valid_len = jnp.array(
        [SEQ_LEN + WINDOW_SIZES[l // NUM_FILTERS] - 1 if l < _NW * NUM_FILTERS else 0
         for l in range(_PADDED_OUT)], dtype=jnp.int32)
    t_idx = jnp.arange(_SEG, dtype=jnp.int32)
    seg_mask = jnp.where(t_idx[:, None] < valid_len[None, :],
                         0.0, -1e30).astype(jnp.float32)            # [SEG, 128]
    mask = jnp.tile(seg_mask, (BATCH, 1))                           # [B*SEG, 128]

    # --- FC: permute rows filter-major -> window-major, pad to 128x128 ---
    fc_w_perm = (raw["fc_w"].reshape(NUM_FILTERS, _NW, NUM_CLASSES)
                 .transpose(1, 0, 2).reshape(_NW * NUM_FILTERS, NUM_CLASSES))
    fc_w_packed = jnp.zeros((_PADDED_OUT, _PADDED_OUT), jnp.float32)
    fc_w_packed = fc_w_packed.at[:_NW * NUM_FILTERS, :NUM_CLASSES].set(fc_w_perm)
    fc_b_packed = jnp.zeros((1, _PADDED_OUT), jnp.float32)
    fc_b_packed = fc_b_packed.at[0, :NUM_CLASSES].set(raw["fc_b"])

    packed = {
        "embedding": raw["embedding"],                              # [V, E]
        "conv_w": conv_w_packed,
        "conv_b": conv_b_packed,
        "mask": mask,
        "fc_w": fc_w_packed,
        "fc_b": fc_b_packed,
    }
    return raw, packed


# ---------------------------------------------------------------------------
# Plain-JAX reference of the PyTorch forward (same weight conventions)
# ---------------------------------------------------------------------------
def cnn_reference(token_ids, raw):
    B, T = token_ids.shape
    emb = raw["embedding"][token_ids]                               # [B, T, E]
    feats = []
    for ws, W, bias in zip(WINDOW_SIZES, raw["conv_w"], raw["conv_b"]):
        pad = ws - 1
        out_len = T + ws - 1
        x_pad = jnp.pad(emb, ((0, 0), (pad, pad), (0, 0)))
        cols = jnp.concatenate([x_pad[:, k:k + out_len, :] for k in range(ws)],
                               axis=-1)                             # [B, out_len, ws*E]
        w_flat = W.reshape(NUM_FILTERS, ws * EMBEDDING_SIZE)
        conv = jnp.einsum("btc,fc->btf", cols, w_flat,
                          precision=jax.lax.Precision.HIGHEST) + bias
        feats.append(jnp.max(jnp.clip(conv, 0.0, 6.0), axis=1))     # [B, NF]
    stacked = jnp.stack(feats, axis=-1)                             # [B, NF, NW]
    flat = stacked.reshape(B, -1)                                   # filter-major flatten
    return jnp.dot(flat, raw["fc_w"],
                   precision=jax.lax.Precision.HIGHEST) + raw["fc_b"]


if __name__ == "__main__":
    key = jax.random.PRNGKey(0)
    k_param, k_ids = jax.random.split(key)
    raw, packed = init_params(k_param)
    token_ids = jax.random.randint(
        k_ids, (BATCH, SEQ_LEN), minval=0, maxval=VOCAB_SIZE, dtype=jnp.int32)

    logits = cnn_forward(token_ids, packed)
    jax.block_until_ready(logits)

    assert logits.shape == (BATCH, NUM_CLASSES), logits.shape
    assert logits.dtype == jnp.float32

    ref = cnn_reference(token_ids, raw)
    max_err = jnp.max(jnp.abs(logits - ref))
    assert jnp.allclose(logits, ref, atol=1e-2, rtol=1e-2), float(max_err)
    print("KERNEL_OK")
</pallas_src>

<mosaic_0001>
module attributes {stable_mosaic.version = 11 : i64} {
  func.func @_textcnn_kernel(%arg0: memref<16x1xi32, #tpu.memory_space<vmem>>, %arg1: memref<64x32xf32, #tpu.memory_space<vmem>>, %arg2: memref<320x128xf32, #tpu.memory_space<vmem>>, %arg3: memref<1x128xf32, #tpu.memory_space<vmem>>, %arg4: memref<48x128xf32, #tpu.memory_space<vmem>>, %arg5: memref<128x128xf32, #tpu.memory_space<vmem>>, %arg6: memref<1x128xf32, #tpu.memory_space<vmem>>, %arg7: memref<2x128xf32, #tpu.memory_space<vmem>>) attributes {dimension_semantics = [], scalar_prefetch = 0 : i64, scratch_operands = 0 : i64, tpu.core_type = #tpu.core_type<tc>} {
    %c0 = arith.constant 0 : index
    %c0_0 = arith.constant 0 : index
    %0 = vector.load %arg0[%c0, %c0_0] : memref<16x1xi32, #tpu.memory_space<vmem>>, vector<16x1xi32>
    %1 = tpu.iota {dimensions = array<i32: 1>} : vector<16x64xi32>
    %2 = vector.broadcast %0 : vector<16x1xi32> to vector<16x64xi32>
    %3 = arith.cmpi eq, %1, %2 : vector<16x64xi32>
    %4 = arith.extui %3 : vector<16x64xi1> to vector<16x64xi32>
    %5 = arith.sitofp %4 : vector<16x64xi32> to vector<16x64xf32>
    %c0_1 = arith.constant 0 : index
    %c0_2 = arith.constant 0 : index
    %6 = vector.load %arg1[%c0_1, %c0_2] : memref<64x32xf32, #tpu.memory_space<vmem>>, vector<64x32xf32>
    %cst = arith.constant dense<0.000000e+00> : vector<16x32xf32>
    %7 = tpu.matmul %5, %6, %cst {dimension_numbers = #tpu.dot_dimension_numbers<[1], [0], [0], [1], [0, 0, 1, 1], [], []>} : vector<16x64xf32>, vector<64x32xf32>, vector<16x32xf32> -> vector<16x32xf32>
    %cst_3 = arith.constant 0.000000e+00 : f32
    %8 = vector.broadcast %cst_3 : f32 to vector<16x32xf32>
    %9 = vector.extract_strided_slice %7 {offsets = [0, 0], sizes = [8, 32], strides = [1, 1]} : vector<16x32xf32> to vector<8x32xf32>
    %10 = tpu.concatenate %8, %9, %8 in 0 : vector<16x32xf32>, vector<8x32xf32>, vector<16x32xf32> -> vector<40x32xf32>
    %11 = vector.extract_strided_slice %10 {offsets = [7, 0], sizes = [24, 32], strides = [1, 1]} : vector<40x32xf32> to vector<24x32xf32>
    %12 = vector.extract_strided_slice %10 {offsets = [8, 0], sizes = [24, 32], strides = [1, 1]} : vector<40x32xf32> to vector<24x32xf32>
    %13 = vector.extract_strided_slice %10 {offsets = [9, 0], sizes = [24, 32], strides = [1, 1]} : vector<40x32xf32> to vector<24x32xf32>
    %14 = vector.extract_strided_slice %10 {offsets = [10, 0], sizes = [24, 32], strides = [1, 1]} : vector<40x32xf32> to vector<24x32xf32>
    %15 = vector.extract_strided_slice %10 {offsets = [11, 0], sizes = [24, 32], strides = [1, 1]} : vector<40x32xf32> to vector<24x32xf32>
    %16 = vector.extract_strided_slice %10 {offsets = [12, 0], sizes = [24, 32], strides = [1, 1]} : vector<40x32xf32> to vector<24x32xf32>
    %17 = vector.extract_strided_slice %10 {offsets = [13, 0], sizes = [24, 32], strides = [1, 1]} : vector<40x32xf32> to vector<24x32xf32>
    %18 = vector.extract_strided_slice %10 {offsets = [14, 0], sizes = [24, 32], strides = [1, 1]} : vector<40x32xf32> to vector<24x32xf32>
    %19 = vector.extract_strided_slice %10 {offsets = [15, 0], sizes = [24, 32], strides = [1, 1]} : vector<40x32xf32> to vector<24x32xf32>
    %20 = vector.extract_strided_slice %10 {offsets = [16, 0], sizes = [24, 32], strides = [1, 1]} : vector<40x32xf32> to vector<24x32xf32>
    %21 = tpu.concatenate %11, %12, %13, %14, %15, %16, %17, %18, %19, %20 in 1 : vector<24x32xf32>, vector<24x32xf32>, vector<24x32xf32>, vector<24x32xf32>, vector<24x32xf32>, vector<24x32xf32>, vector<24x32xf32>, vector<24x32xf32>, vector<24x32xf32>, vector<24x32xf32> -> vector<24x320xf32>
    %22 = vector.extract_strided_slice %7 {offsets = [8, 0], sizes = [8, 32], strides = [1, 1]} : vector<16x32xf32> to vector<8x32xf32>
    %23 = tpu.concatenate %8, %22, %8 in 0 : vector<16x32xf32>, vector<8x32xf32>, vector<16x32xf32> -> vector<40x32xf32>
    %24 = vector.extract_strided_slice %23 {offsets = [7, 0], sizes = [24, 32], strides = [1, 1]} : vector<40x32xf32> to vector<24x32xf32>
    %25 = vector.extract_strided_slice %23 {offsets = [8, 0], sizes = [24, 32], strides = [1, 1]} : vector<40x32xf32> to vector<24x32xf32>
    %26 = vector.extract_strided_slice %23 {offsets = [9, 0], sizes = [24, 32], strides = [1, 1]} : vector<40x32xf32> to vector<24x32xf32>
    %27 = vector.extract_strided_slice %23 {offsets = [10, 0], sizes = [24, 32], strides = [1, 1]} : vector<40x32xf32> to vector<24x32xf32>
    %28 = vector.extract_strided_slice %23 {offsets = [11, 0], sizes = [24, 32], strides = [1, 1]} : vector<40x32xf32> to vector<24x32xf32>
    %29 = vector.extract_strided_slice %23 {offsets = [12, 0], sizes = [24, 32], strides = [1, 1]} : vector<40x32xf32> to vector<24x32xf32>
    %30 = vector.extract_strided_slice %23 {offsets = [13, 0], sizes = [24, 32], strides = [1, 1]} : vector<40x32xf32> to vector<24x32xf32>
    %31 = vector.extract_strided_slice %23 {offsets = [14, 0], sizes = [24, 32], strides = [1, 1]} : vector<40x32xf32> to vector<24x32xf32>
    %32 = vector.extract_strided_slice %23 {offsets = [15, 0], sizes = [24, 32], strides = [1, 1]} : vector<40x32xf32> to vector<24x32xf32>
    %33 = vector.extract_strided_slice %23 {offsets = [16, 0], sizes = [24, 32], strides = [1, 1]} : vector<40x32xf32> to vector<24x32xf32>
    %34 = tpu.concatenate %24, %25, %26, %27, %28, %29, %30, %31, %32, %33 in 1 : vector<24x32xf32>, vector<24x32xf32>, vector<24x32xf32>, vector<24x32xf32>, vector<24x32xf32>, vector<24x32xf32>, vector<24x32xf32>, vector<24x32xf32>, vector<24x32xf32>, vector<24x32xf32> -> vector<24x320xf32>
    %35 = tpu.concatenate %21, %34 in 0 : vector<24x320xf32>, vector<24x320xf32> -> vector<48x320xf32>
    %c0_4 = arith.constant 0 : index
    %c0_5 = arith.constant 0 : index
    %36 = vector.load %arg2[%c0_4, %c0_5] : memref<320x128xf32, #tpu.memory_space<vmem>>, vector<320x128xf32>
    %cst_6 = arith.constant dense<0.000000e+00> : vector<48x128xf32>
    %37 = tpu.matmul %35, %36, %cst_6 {dimension_numbers = #tpu.dot_dimension_numbers<[1], [0], [0], [1], [0, 0, 1, 1], [], []>} : vector<48x320xf32>, vector<320x128xf32>, vector<48x128xf32> -> vector<48x128xf32>
    %c0_7 = arith.constant 0 : index
    %c0_8 = arith.constant 0 : index
    %38 = vector.load %arg4[%c0_7, %c0_8] : memref<48x128xf32, #tpu.memory_space<vmem>>, vector<48x128xf32>
    %39 = arith.addf %37, %38 : vector<48x128xf32>
    %40 = vector.extract_strided_slice %39 {offsets = [0, 0], sizes = [24, 128], strides = [1, 1]} : vector<48x128xf32> to vector<24x128xf32>
    %cst_9 = arith.constant dense<0xFF800000> : vector<128xf32>
    %41 = vector.multi_reduction <maximumf>, %40, %cst_9 [0] : vector<24x128xf32> to vector<128xf32>
    %42 = vector.shape_cast %41 : vector<128xf32> to vector<1x128xf32>
    %43 = vector.extract_strided_slice %39 {offsets = [24, 0], sizes = [24, 128], strides = [1, 1]} : vector<48x128xf32> to vector<24x128xf32>
    %cst_10 = arith.constant dense<0xFF800000> : vector<128xf32>
    %44 = vector.multi_reduction <maximumf>, %43, %cst_10 [0] : vector<24x128xf32> to vector<128xf32>
    %45 = vector.shape_cast %44 : vector<128xf32> to vector<1x128xf32>
    %46 = tpu.concatenate %42, %45 in 0 : vector<1x128xf32>, vector<1x128xf32> -> vector<2x128xf32>
    %c0_11 = arith.constant 0 : index
    %c0_12 = arith.constant 0 : index
    %47 = vector.load %arg3[%c0_11, %c0_12] : memref<1x128xf32, #tpu.memory_space<vmem>>, vector<1x128xf32>
    %48 = vector.broadcast %47 : vector<1x128xf32> to vector<2x128xf32>
    %49 = arith.addf %46, %48 : vector<2x128xf32>
    %cst_13 = arith.constant 0.000000e+00 : f32
    %cst_14 = arith.constant 6.000000e+00 : f32
    %50 = vector.broadcast %cst_13 : f32 to vector<2x128xf32>
    %51 = arith.maximumf %50, %49 : vector<2x128xf32>
    %52 = vector.broadcast %cst_14 : f32 to vector<2x128xf32>
    %53 = arith.minimumf %52, %51 : vector<2x128xf32>
    %c0_15 = arith.constant 0 : index
    %c0_16 = arith.constant 0 : index
    %54 = vector.load %arg5[%c0_15, %c0_16] : memref<128x128xf32, #tpu.memory_space<vmem>>, vector<128x128xf32>
    %cst_17 = arith.constant dense<0.000000e+00> : vector<2x128xf32>
    %55 = tpu.matmul %53, %54, %cst_17 {dimension_numbers = #tpu.dot_dimension_numbers<[1], [0], [0], [1], [0, 0, 1, 1], [], []>} : vector<2x128xf32>, vector<128x128xf32>, vector<2x128xf32> -> vector<2x128xf32>
    %c0_18 = arith.constant 0 : index
    %c0_19 = arith.constant 0 : index
    %56 = vector.load %arg6[%c0_18, %c0_19] : memref<1x128xf32, #tpu.memory_space<vmem>>, vector<1x128xf32>
    %57 = vector.broadcast %56 : vector<1x128xf32> to vector<2x128xf32>
    %58 = arith.addf %55, %57 : vector<2x128xf32>
    %c0_20 = arith.constant 0 : index
    %c0_21 = arith.constant 0 : index
    %59 = vector.load %arg7[%c0_20, %c0_21] : memref<2x128xf32, #tpu.memory_space<vmem>>, vector<2x128xf32>
    tpu.vector_store %arg7[%c0_20, %c0_21], %58 {strides = array<i32>} : memref<2x128xf32, #tpu.memory_space<vmem>>, vector<2x128xf32>,
    return
  }
}

</mosaic_0001>

<llo_original>
// kernel: cnn_forward.1
$region0: #{cnn_forward.1}
  #allocation0 [shape = 'u32[]', space=smem, size = 0x4, offset = 0x4, fixed_abs, tag = 'smem constant byte address 0x4 - core index']
  #allocation1 [shape = 'u32[144,128]{1,0:T(1,128)}', space=vmem, size = 0x12000, scoped, tag = 'internal scratch']
  %s0 = inlined_call_operand.vmem [shape: s32[16,1], index: 0, kind: input, shape index: {}]
  %s1 = inlined_call_operand.vmem [shape: f32[64,32], index: 1, kind: input, shape index: {}]
  %s2 = inlined_call_operand.hbm [shape: f32[320,128], index: 2, kind: input, shape index: {}]
  %s3 = inlined_call_operand.vmem [shape: f32[1,128], index: 3, kind: input, shape index: {}]
  %s4 = inlined_call_operand.vmem [shape: f32[48,128], index: 4, kind: input, shape index: {}]
  %s5 = inlined_call_operand.hbm [shape: f32[128,128], index: 5, kind: input, shape index: {}]
  %s6 = inlined_call_operand.vmem [shape: f32[1,128], index: 6, kind: input, shape index: {}]
  %s7 = inlined_call_operand.hbm [shape: f32[2,128], index: 7, kind: output, shape index: {}]
  %s8 = sld [smem:[#allocation0]]
  $region46: #{cnn_forward.1} parent=0
    _
  %s10 = ssub.s32 1, %s8
  %s11 = scalar_select 0, %s10, %s8
  $region1: #{cnn_forward.1} parent=0
    #allocation2 [shape = 'u8[163840]{0}', space=vmem, size = 0x28000, scoped, tag = 'input window, operand 2, single buffered']
    #allocation3 [shape = 's32[1]{0}', space=sflag, size = 0x4, scoped, tag = 'scoped memory for cnn_forward.1']
    #allocation4 [shape = 's32[1]{0}', space=sflag, size = 0x4, scoped, tag = 'scoped memory for cnn_forward.1']
    #allocation5 [shape = 'u8[65536]{0}', space=vmem, size = 0x10000, scoped, tag = 'input window, operand 5, single buffered']
    #allocation6 [shape = 's32[1]{0}', space=sflag, size = 0x4, scoped, tag = 'scoped memory for cnn_forward.1']
    #allocation7 [shape = 'u8[1024]{0}', space=vmem, size = 0x400, scoped, tag = 'output window, operand 0, single buffered']
    %12 = vsyncpa [#allocation3], 0
    %13 = vsyncpa [#allocation6], 0
    %14 = vsyncpa [#allocation4], 0
    // Predicated region
    $region2: #{cnn_forward.1} parent=1 // pred_check
      _
    $region3: #{cnn_forward.1} parent=1 // pred_check_branch
      %16 = sbr.rel (0) target = $region5
    $region4: #{cnn_forward.1} parent=1 // pred_region
      _
    $region5: #{cnn_forward.1} parent=1 // pred_fallthru
      _
    // Predicated region
    $region6: #{cnn_forward.1} parent=1 // pred_check
      _
    $region7: #{cnn_forward.1} parent=1 // pred_check_branch
      %18 = sbr.rel (0) target = $region9
    $region8: #{cnn_forward.1} parent=1 // pred_region
      _
    $region9: #{cnn_forward.1} parent=1 // pred_fallthru
      _
    // Predicated region
    $region10: #{cnn_forward.1} parent=1 // pred_check
      _
    $region11: #{cnn_forward.1} parent=1 // pred_check_branch
      %20 = sbr.rel (0) target = $region13
    $region12: #{cnn_forward.1} parent=1 // pred_region
      %s22 = ssub.s32 5120, 5120
      %23 = vsyncadd [#allocation3], %s22
      %s24 = sshll.u32 [#allocation2], 4
      %s25 = int_to_ptr.vmem [resolvable:$true] %s24
      %30 = dma.hbm_to_vmem [thread:$0]  %s2, 5120, %s25, [#allocation3], 128, 128, 8
    $region13: #{cnn_forward.1} parent=1 // pred_fallthru
      _
    // Predicated region
    $region14: #{cnn_forward.1} parent=1 // pred_check
      _
    $region15: #{cnn_forward.1} parent=1 // pred_check_branch
      %32 = sbr.rel (0) target = $region17
    $region16: #{cnn_forward.1} parent=1 // pred_region
      _
    $region17: #{cnn_forward.1} parent=1 // pred_fallthru
      _
    // Predicated region
    $region18: #{cnn_forward.1} parent=1 // pred_check
      _
    $region19: #{cnn_forward.1} parent=1 // pred_check_branch
      %34 = sbr.rel (0) target = $region21
    $region20: #{cnn_forward.1} parent=1 // pred_region
      _
    $region21: #{cnn_forward.1} parent=1 // pred_fallthru
      _
    // Predicated region
    $region22: #{cnn_forward.1} parent=1 // pred_check
      _
    $region23: #{cnn_forward.1} parent=1 // pred_check_branch
      %36 = sbr.rel (0) target = $region25
    $region24: #{cnn_forward.1} parent=1 // pred_region
      %s38 = ssub.s32 2048, 2048
      %39 = vsyncadd [#allocation6], %s38
      %s40 = sshll.u32 [#allocation5], 4
      %s41 = int_to_ptr.vmem [resolvable:$true] %s40
      %46 = dma.hbm_to_vmem [thread:$0]  %s5, 2048, %s41, [#allocation6], 128, 128, 8
    $region25: #{cnn_forward.1} parent=1 // pred_fallthru
      _
    // Predicated region
    $region26: #{cnn_forward.1} parent=1 // pred_check
      _
    $region27: #{cnn_forward.1} parent=1 // pred_check_branch
      %48 = sbr.rel (0) target = $region29
    $region28: #{cnn_forward.1} parent=1 // pred_region
      _
    $region29: #{cnn_forward.1} parent=1 // pred_fallthru
      _
    // Predicated region
    $region30: #{cnn_forward.1} parent=1 // pred_check
      _
    $region31: #{cnn_forward.1} parent=1 // pred_check_branch
      %50 = sbr.rel (0) target = $region33
    $region32: #{cnn_forward.1} parent=1 // pred_region
      %51 = dma.done [#allocation3], 5120
    $region33: #{cnn_forward.1} parent=1 // pred_fallthru
      _
    // Predicated region
    $region34: #{cnn_forward.1} parent=1 // pred_check
      _
    $region35: #{cnn_forward.1} parent=1 // pred_check_branch
      %53 = sbr.rel (0) target = $region37
    $region36: #{cnn_forward.1} parent=1 // pred_region
      %54 = dma.done [#allocation6], 2048
    $region37: #{cnn_forward.1} parent=1 // pred_fallthru
      _
    %v55 = vld [vmem:[%s0] sm:$0xff]
    %v56 = vld [vmem:[%s0 + $0x8] sm:$0xff]
    %v57 = vlaneseq
    %v58 = vand.u32 %v57, 127
    %59 = vset.pattern.permute.xlu0 0
    %60 = vperm.xlu0 %59, %v55
    %v61 = vpop.permute.xlu0 %60
    %62 = vset.pattern.permute.xlu0 0
    %63 = vperm.xlu0 %62, %v56
    %v64 = vpop.permute.xlu0 %63
    %vm65 = vcmp.eq.s32.totalorder %v58, %v61
    %vm66 = vcmp.eq.s32.totalorder %v58, %v64
    %v67 = vsel %vm65, 1, 0
    %v68 = vsel %vm66, 1, 0
    %v69 = vcvt.s32.f32 %v67
    %v70 = vcvt.s32.f32 %v68
    %v71 = vld [vmem:[%s1] sm:$0xff]
    %v72 = vld [vmem:[%s1 + $0x8] sm:$0xff]
    %v73 = vld [vmem:[%s1 + $0x10] sm:$0xff]
    %v74 = vld [vmem:[%s1 + $0x18] sm:$0xff]
    %v75 = vld [vmem:[%s1 + $0x20] sm:$0xff]
    %v76 = vld [vmem:[%s1 + $0x28] sm:$0xff]
    %v77 = vld [vmem:[%s1 + $0x30] sm:$0xff]
    %v78 = vld [vmem:[%s1 + $0x38] sm:$0xff]
    %vm79 = vcmask 523264
    %v81 = vsel %vm79, %v69, 0
    %v84 = vsel %vm79, %v70, 0
    %86 = vmatprep.subr.mxu0 0.0
    %87 = vmatpush1.msra.mxu0 0.0
    %88 = vmatprep.subr.mxu0 0.0
    %89 = vmatpush1.msra.mxu0 0.0
    %90 = vmatprep.subr.mxu0 0.0
    %91 = vmatpush1.msra.mxu0 0.0
    %92 = vmatprep.subr.mxu0 0.0
    %93 = vmatpush1.msra.mxu0 0.0
    %94 = vmatprep.subr.mxu0 0.0
    %95 = vmatpush1.msra.mxu0 0.0
    %96 = vmatprep.subr.mxu0 0.0
    %97 = vmatpush1.msra.mxu0 0.0
    %98 = vmatprep.subr.mxu0 0.0
    %99 = vmatpush1.msra.mxu0 0.0
    %100 = vmatprep.subr.mxu0 0.0
    %101 = vmatpush1.msra.mxu0 0.0
    %102 = vmatprep.subr.mxu0 0.0
    %103 = vmatpush1.msra.mxu0 %v78
    %104 = vmatprep.subr.mxu0 0.0
    %105 = vmatpush1.msra.mxu0 %v77
    %106 = vmatprep.subr.mxu0 0.0
    %107 = vmatpush1.msra.mxu0 %v76
    %108 = vmatprep.subr.mxu0 0.0
    %109 = vmatpush1.msra.mxu0 %v75
    %110 = vmatprep.subr.mxu0 0.0
    %111 = vmatpush1.msra.mxu0 %v74
    %112 = vmatprep.subr.mxu0 0.0
    %113 = vmatpush1.msra.mxu0 %v73
    %114 = vmatprep.subr.mxu0 0.0
    %115 = vmatpush1.msra.mxu0 %v72
    %116 = vmatprep.subr.mxu0 0.0
    %117 = vmatpush1.msra.mxu0 %v71
    %118 = vmatprep.subr.mxu0 0.0
    %119 = vmatpush2.msra.mxu0 0.0
    %120 = vmatprep.subr.mxu0 0.0
    %121 = vmatpush2.msra.mxu0 0.0
    %122 = vmatprep.subr.mxu0 0.0
    %123 = vmatpush2.msra.mxu0 0.0
    %124 = vmatprep.subr.mxu0 0.0
    %125 = vmatpush2.msra.mxu0 0.0
    %126 = vmatprep.subr.mxu0 0.0
    %127 = vmatpush2.msra.mxu0 0.0
    %128 = vmatprep.subr.mxu0 0.0
    %129 = vmatpush2.msra.mxu0 0.0
    %130 = vmatprep.subr.mxu0 0.0
    %131 = vmatpush2.msra.mxu0 0.0
    %132 = vmatprep.subr.mxu0 0.0
    %133 = vmatpush2.msra.mxu0 0.0
    %134 = vmatprep.subr.mxu0 0.0
    %135 = vmatpush2.msra.mxu0 0.0
    %136 = vmatprep.subr.mxu0 0.0
    %137 = vmatpush2.msra.mxu0 0.0
    %138 = vmatprep.subr.mxu0 0.0
    %139 = vmatpush2.msra.mxu0 0.0
    %140 = vmatprep.subr.mxu0 0.0
    %141 = vmatpush2.msra.mxu0 0.0
    %142 = vmatprep.subr.mxu0 0.0
    %143 = vmatpush2.msra.mxu0 0.0
    %144 = vmatprep.subr.mxu0 0.0
    %145 = vmatpush2.msra.mxu0 0.0
    %146 = vmatprep.subr.mxu0 0.0
    %147 = vmatpush2.msra.mxu0 0.0
    %148 = vmatprep.subr.mxu0 0.0
    %149 = vmatpush2.msra.mxu0 0.0
    %150 = vmatprep.mubr.f32.mxu0 0.0
    %151 = vmatmul.mubr.f32.gmra.mxu0 %v81
    %v152 = vpop.f32.mrf.mxu0
    %v153 = vadd.f32 0.0, %v152
    %v154 = vpop.f32.mrf.mxu0
    %155 = vmatprep.mubr.f32.mxu0 0.0
    %156 = vmatmul.mubr.f32.gmra.mxu0 %v84
    %v157 = vpop.f32.mrf.mxu0
    %v158 = vadd.f32 0.0, %v157
    %v159 = vpop.f32.mrf.mxu0
    %160 = vdwg.mxu0
    %vm163 = vcmask 1046528
    %v164 = vrot.slane 0.0, 1
    %v165 = vrot.slane %v153, 1
    %v166 = vsel %vm163, %v164, %v165
    %v167 = vsel %vm163, %v165, %v164
    %168 = vrot.lane.b32.xlu0 %v164, 32
    %v169 = vpop.permute.xlu0 %168
    %170 = vrot.lane.b32.xlu0 %v166, 32
    %v171 = vpop.permute.xlu0 %170
    %172 = vrot.lane.b32.xlu0 %v167, 32
    %v173 = vpop.permute.xlu0 %172
    %vm177 = vcmask 1045504
    %v178 = vrot.slane 0.0, 2
    %v179 = vrot.slane %v153, 2
    %v180 = vsel %vm177, %v178, %v179
    %v181 = vsel %vm177, %v179, %v178
    %v182 = vsel %vm177, %v178, %v178
    %183 = vrot.lane.b32.xlu0 %v178, 64
    %v184 = vpop.permute.xlu0 %183
    %185 = vrot.lane.b32.xlu0 %v180, 64
    %v186 = vpop.permute.xlu0 %185
    %187 = vrot.lane.b32.xlu0 %v181, 64
    %v188 = vpop.permute.xlu0 %187
    %189 = vrot.lane.b32.xlu0 %v182, 64
    %v190 = vpop.permute.xlu0 %189
    %vm195 = vcmask 1044480
    %v196 = vrot.slane 0.0, 3
    %v197 = vrot.slane %v153, 3
    %v198 = vsel %vm195, %v196, %v197
    %v199 = vsel %vm195, %v197, %v196
    %v200 = vsel %vm195, %v196, %v196
    %201 = vrot.lane.b32.xlu0 %v196, 96
    %v202 = vpop.permute.xlu0 %201
    %203 = vrot.lane.b32.xlu0 %v198, 96
    %v204 = vpop.permute.xlu0 %203
    %205 = vrot.lane.b32.xlu0 %v199, 96
    %v206 = vpop.permute.xlu0 %205
    %207 = vrot.lane.b32.xlu0 %v200, 96
    %v208 = vpop.permute.xlu0 %207
    %vm213 = vcmask 1043456
    %v214 = vrot.slane 0.0, 4
    %v215 = vrot.slane %v153, 4
    %v216 = vsel %vm213, %v214, %v215
    %v217 = vsel %vm213, %v215, %v214
    %v218 = vsel %vm213, %v214, %v214
    %vm223 = vcmask 1042432
    %v224 = vrot.slane 0.0, 5
    %v225 = vrot.slane %v153, 5
    %v226 = vsel %vm223, %v224, %v225
    %v227 = vsel %vm223, %v225, %v224
    %v228 = vsel %vm223, %v224, %v224
    %229 = vrot.lane.b32.xlu0 %v224, 32
    %v230 = vpop.permute.xlu0 %229
    %231 = vrot.lane.b32.xlu0 %v226, 32
    %v232 = vpop.permute.xlu0 %231
    %233 = vrot.lane.b32.xlu0 %v227, 32
    %v234 = vpop.permute.xlu0 %233
    %235 = vrot.lane.b32.xlu0 %v228, 32
    %v236 = vpop.permute.xlu0 %235
    %vm241 = vcmask 1041408
    %v242 = vrot.slane 0.0, 6
    %v243 = vrot.slane %v153, 6
    %v244 = vsel %vm241, %v242, %v243
    %v245 = vsel %vm241, %v243, %v242
    %v246 = vsel %vm241, %v242, %v242
    %247 = vrot.lane.b32.xlu0 %v242, 64
    %v248 = vpop.permute.xlu0 %247
    %249 = vrot.lane.b32.xlu0 %v244, 64
    %v250 = vpop.permute.xlu0 %249
    %251 = vrot.lane.b32.xlu0 %v245, 64
    %v252 = vpop.permute.xlu0 %251
    %253 = vrot.lane.b32.xlu0 %v246, 64
    %v254 = vpop.permute.xlu0 %253
    %vm259 = vcmask 1040384
    %v260 = vrot.slane 0.0, 7
    %v261 = vrot.slane %v153, 7
    %v262 = vsel %vm259, %v260, %v261
    %v263 = vsel %vm259, %v261, %v260
    %v264 = vsel %vm259, %v260, %v260
    %265 = vrot.lane.b32.xlu0 %v260, 96
    %v266 = vpop.permute.xlu0 %265
    %267 = vrot.lane.b32.xlu0 %v262, 96
    %v268 = vpop.permute.xlu0 %267
    %269 = vrot.lane.b32.xlu0 %v263, 96
    %v270 = vpop.permute.xlu0 %269
    %271 = vrot.lane.b32.xlu0 %v264, 96
    %v272 = vpop.permute.xlu0 %271
    %v277 = vsel %vm163, %v164, %v164
    %278 = vrot.lane.b32.xlu0 %v165, 32
    %v279 = vpop.permute.xlu0 %278
    %280 = vrot.lane.b32.xlu0 %v277, 32
    %v281 = vpop.permute.xlu0 %280
    %vm284 = vcmask 261120
    %v285 = vsel %vm284, 0.0, %v169
    %v286 = vsel %vm284, 0.0, %v171
    %v287 = vsel %vm284, %v153, %v173
    %v288 = vsel %vm79, %v285, %v184
    %v289 = vsel %vm79, %v286, %v186
    %v290 = vsel %vm79, %v287, %v188
    %v291 = vsel %vm79, %v285, %v190
    %vm292 = vcmask 785408
    %v293 = vsel %vm292, %v288, %v202
    %v294 = vsel %vm292, %v289, %v204
    %v295 = vsel %vm292, %v290, %v206
    %v296 = vsel %vm292, %v291, %v208
    %v297 = vsel %vm284, %v214, %v230
    %v298 = vsel %vm284, %v216, %v232
    %v299 = vsel %vm284, %v217, %v234
    %v300 = vsel %vm284, %v218, %v236
    %v301 = vsel %vm79, %v297, %v248
    %v302 = vsel %vm79, %v298, %v250
    %v303 = vsel %vm79, %v299, %v252
    %v304 = vsel %vm79, %v300, %v254
    %v305 = vsel %vm292, %v301, %v266
    %v306 = vsel %vm292, %v302, %v268
    %v307 = vsel %vm292, %v303, %v270
    %v308 = vsel %vm292, %v304, %v272
    %v309 = vsel %vm284, 0.0, %v279
    %v310 = vsel %vm284, 0.0, %v281
    %v312 = vrot.slane %v158, 1
    %v313 = vsel %vm163, %v164, %v312
    %v314 = vsel %vm163, %v312, %v164
    %315 = vrot.lane.b32.xlu0 %v313, 32
    %v316 = vpop.permute.xlu0 %315
    %317 = vrot.lane.b32.xlu0 %v314, 32
    %v318 = vpop.permute.xlu0 %317
    %v321 = vrot.slane %v158, 2
    %v322 = vsel %vm177, %v178, %v321
    %v323 = vsel %vm177, %v321, %v178
    %324 = vrot.lane.b32.xlu0 %v322, 64
    %v325 = vpop.permute.xlu0 %324
    %326 = vrot.lane.b32.xlu0 %v323, 64
    %v327 = vpop.permute.xlu0 %326
    %v330 = vrot.slane %v158, 3
    %v331 = vsel %vm195, %v196, %v330
    %v332 = vsel %vm195, %v330, %v196
    %333 = vrot.lane.b32.xlu0 %v331, 96
    %v334 = vpop.permute.xlu0 %333
    %335 = vrot.lane.b32.xlu0 %v332, 96
    %v336 = vpop.permute.xlu0 %335
    %v339 = vrot.slane %v158, 4
    %v340 = vsel %vm213, %v214, %v339
    %v341 = vsel %vm213, %v339, %v214
    %v344 = vrot.slane %v158, 5
    %v345 = vsel %vm223, %v224, %v344
    %v346 = vsel %vm223, %v344, %v224
    %347 = vrot.lane.b32.xlu0 %v345, 32
    %v348 = vpop.permute.xlu0 %347
    %349 = vrot.lane.b32.xlu0 %v346, 32
    %v350 = vpop.permute.xlu0 %349
    %v353 = vrot.slane %v158, 6
    %v354 = vsel %vm241, %v242, %v353
    %v355 = vsel %vm241, %v353, %v242
    %356 = vrot.lane.b32.xlu0 %v354, 64
    %v357 = vpop.permute.xlu0 %356
    %358 = vrot.lane.b32.xlu0 %v355, 64
    %v359 = vpop.permute.xlu0 %358
    %v362 = vrot.slane %v158, 7
    %v363 = vsel %vm259, %v260, %v362
    %v364 = vsel %vm259, %v362, %v260
    %365 = vrot.lane.b32.xlu0 %v363, 96
    %v366 = vpop.permute.xlu0 %365
    %367 = vrot.lane.b32.xlu0 %v364, 96
    %v368 = vpop.permute.xlu0 %367
    %371 = vrot.lane.b32.xlu0 %v312, 32
    %v372 = vpop.permute.xlu0 %371
    %v374 = vsel %vm284, 0.0, %v316
    %v375 = vsel %vm284, %v158, %v318
    %v376 = vsel %vm79, %v374, %v325
    %v377 = vsel %vm79, %v375, %v327
    %v378 = vsel %vm292, %v376, %v334
    %v379 = vsel %vm292, %v377, %v336
    %v380 = vsel %vm284, %v340, %v348
    %v381 = vsel %vm284, %v341, %v350
    %v382 = vsel %vm79, %v380, %v357
    %v383 = vsel %vm79, %v381, %v359
    %v384 = vsel %vm292, %v382, %v366
    %v385 = vsel %vm292, %v383, %v368
    %v386 = vsel %vm284, 0.0, %v372
    %v399 = vrot.slane %v293, 7
    %v400 = vrot.slane %v294, 7
    %v401 = vsel %vm259, %v399, %v400
    %v402 = vrot.slane %v305, 7
    %v403 = vrot.slane %v306, 7
    %v404 = vsel %vm259, %v402, %v403
    %v405 = vrot.slane %v309, 7
    %v406 = vrot.slane %v287, 7
    %v407 = vsel %vm259, %v405, %v406
    %v408 = vrot.slane %v295, 7
    %v409 = vsel %vm259, %v400, %v408
    %v410 = vrot.slane %v307, 7
    %v411 = vsel %vm259, %v403, %v410
    %v412 = vrot.slane %v310, 7
    %v413 = vsel %vm259, %v406, %v412
    %v414 = vrot.slane %v296, 7
    %v415 = vsel %vm259, %v408, %v414
    %v416 = vrot.slane %v308, 7
    %v417 = vsel %vm259, %v410, %v416
    %v418 = vrot.slane %v285, 7
    %v419 = vsel %vm259, %v412, %v418
    %v432 = vrot.slane %v378, 7
    %v433 = vsel %vm259, %v399, %v432
    %v434 = vrot.slane %v384, 7
    %v435 = vsel %vm259, %v402, %v434
    %v436 = vrot.slane %v386, 7
    %v437 = vrot.slane %v375, 7
    %v438 = vsel %vm259, %v436, %v437
    %v439 = vrot.slane %v379, 7
    %v440 = vsel %vm259, %v432, %v439
    %v441 = vrot.slane %v385, 7
    %v442 = vsel %vm259, %v434, %v441
    %v443 = vsel %vm259, %v437, %v412
    %v444 = vsel %vm259, %v439, %v414
    %v445 = vsel %vm259, %v441, %v416
    %v452 = vld [vmem:[#allocation2] sm:$0xff]
    %v453 = vld [vmem:[#allocation2 + $0x8] sm:$0xff]
    %v454 = vld [vmem:[#allocation2 + $0x10] sm:$0xff]
    %v455 = vld [vmem:[#allocation2 + $0x18] sm:$0xff]
    %v456 = vld [vmem:[#allocation2 + $0x20] sm:$0xff]
    %v457 = vld [vmem:[#allocation2 + $0x28] sm:$0xff]
    %v458 = vld [vmem:[#allocation2 + $0x30] sm:$0xff]
    %v459 = vld [vmem:[#allocation2 + $0x38] sm:$0xff]
    %v460 = vld [vmem:[#allocation2 + $0x40] sm:$0xff]
    %v461 = vld [vmem:[#allocation2 + $0x48] sm:$0xff]
    %v462 = vld [vmem:[#allocation2 + $0x50] sm:$0xff]
    %v463 = vld [vmem:[#allocation2 + $0x58] sm:$0xff]
    %v464 = vld [vmem:[#allocation2 + $0x60] sm:$0xff]
    %v465 = vld [vmem:[#allocation2 + $0x68] sm:$0xff]
    %v466 = vld [vmem:[#allocation2 + $0x70] sm:$0xff]
    %v467 = vld [vmem:[#allocation2 + $0x78] sm:$0xff]
    %v468 = vld [vmem:[#allocation2 + $0x80] sm:$0xff]
    %v469 = vld [vmem:[#allocation2 + $0x88] sm:$0xff]
    %v470 = vld [vmem:[#allocation2 + $0x90] sm:$0xff]
    %v471 = vld [vmem:[#allocation2 + $0x98] sm:$0xff]
    %v472 = vld [vmem:[#allocation2 + $0xa0] sm:$0xff]
    %v473 = vld [vmem:[#allocation2 + $0xa8] sm:$0xff]
    %v474 = vld [vmem:[#allocation2 + $0xb0] sm:$0xff]
    %v475 = vld [vmem:[#allocation2 + $0xb8] sm:$0xff]
    %v476 = vld [vmem:[#allocation2 + $0xc0] sm:$0xff]
    %v477 = vld [vmem:[#allocation2 + $0xc8] sm:$0xff]
    %v478 = vld [vmem:[#allocation2 + $0xd0] sm:$0xff]
    %v479 = vld [vmem:[#allocation2 + $0xd8] sm:$0xff]
    %v480 = vld [vmem:[#allocation2 + $0xe0] sm:$0xff]
    %v481 = vld [vmem:[#allocation2 + $0xe8] sm:$0xff]
    %v482 = vld [vmem:[#allocation2 + $0xf0] sm:$0xff]
    %v483 = vld [vmem:[#allocation2 + $0xf8] sm:$0xff]
    %v484 = vld [vmem:[#allocation2 + $0x100] sm:$0xff]
    %v485 = vld [vmem:[#allocation2 + $0x108] sm:$0xff]
    %v486 = vld [vmem:[#allocation2 + $0x110] sm:$0xff]
    %v487 = vld [vmem:[#allocation2 + $0x118] sm:$0xff]
    %v488 = vld [vmem:[#allocation2 + $0x120] sm:$0xff]
    %v489 = vld [vmem:[#allocation2 + $0x128] sm:$0xff]
    %v490 = vld [vmem:[#allocation2 + $0x130] sm:$0xff]
    %v491 = vld [vmem:[#allocation2 + $0x138] sm:$0xff]
    %v492 = vld [vmem:[%s4] sm:$0xff]
    %v493 = vld [vmem:[%s4 + $0x8] sm:$0xff]
    %v494 = vld [vmem:[%s4 + $0x10] sm:$0xff]
    %v495 = vld [vmem:[%s4 + $0x18] sm:$0xff]
    %v496 = vld [vmem:[%s4 + $0x20] sm:$0xff]
    %v497 = vld [vmem:[%s4 + $0x28] sm:$0xff]
    %v498 = vsel %vm79, %v407, 0
    %v500 = vsel %vm79, %v413, 0
    %v502 = vsel %vm79, %v419, 0
    %v504 = vsel %vm79, %v438, 0
    %v506 = vsel %vm79, %v443, 0
    %508 = vmatprep.subr.mxu0 0.0
    %509 = vmatpush1.msra.mxu0 %v467
    %510 = vmatprep.subr.mxu0 0.0
    %511 = vmatpush1.msra.mxu0 %v466
    %512 = vmatprep.subr.mxu0 0.0
    %513 = vmatpush1.msra.mxu0 %v465
    %514 = vmatprep.subr.mxu0 0.0
    %515 = vmatpush1.msra.mxu0 %v464
    %516 = vmatprep.subr.mxu0 0.0
    %517 = vmatpush1.msra.mxu0 %v463
    %518 = vmatprep.subr.mxu0 0.0
    %519 = vmatpush1.msra.mxu0 %v462
    %520 = vmatprep.subr.mxu0 0.0
    %521 = vmatpush1.msra.mxu0 %v461
    %522 = vmatprep.subr.mxu0 0.0
    %523 = vmatpush1.msra.mxu0 %v460
    %524 = vmatprep.subr.mxu0 0.0
    %525 = vmatpush1.msra.mxu0 %v459
    %526 = vmatprep.subr.mxu0 0.0
    %527 = vmatpush1.msra.mxu0 %v458
    %528 = vmatprep.subr.mxu0 0.0
    %529 = vmatpush1.msra.mxu0 %v457
    %530 = vmatprep.subr.mxu0 0.0
    %531 = vmatpush1.msra.mxu0 %v456
    %532 = vmatprep.subr.mxu0 0.0
    %533 = vmatpush1.msra.mxu0 %v455
    %534 = vmatprep.subr.mxu0 0.0
    %535 = vmatpush1.msra.mxu0 %v454
    %536 = vmatprep.subr.mxu0 0.0
    %537 = vmatpush1.msra.mxu0 %v453
    %538 = vmatprep.subr.mxu0 0.0
    %539 = vmatpush1.msra.mxu0 %v452
    %540 = vmatprep.subr.mxu0 0.0
    %541 = vmatpush2.msra.mxu0 %v483
    %542 = vmatprep.subr.mxu0 0.0
    %543 = vmatpush2.msra.mxu0 %v482
    %544 = vmatprep.subr.mxu0 0.0
    %545 = vmatpush2.msra.mxu0 %v481
    %546 = vmatprep.subr.mxu0 0.0
    %547 = vmatpush2.msra.mxu0 %v480
    %548 = vmatprep.subr.mxu0 0.0
    %549 = vmatpush2.msra.mxu0 %v479
    %550 = vmatprep.subr.mxu0 0.0
    %551 = vmatpush2.msra.mxu0 %v478
    %552 = vmatprep.subr.mxu0 0.0
    %553 = vmatpush2.msra.mxu0 %v477
    %554 = vmatprep.subr.mxu0 0.0
    %555 = vmatpush2.msra.mxu0 %v476
    %556 = vmatprep.subr.mxu0 0.0
    %557 = vmatpush2.msra.mxu0 %v475
    %558 = vmatprep.subr.mxu0 0.0
    %559 = vmatpush2.msra.mxu0 %v474
    %560 = vmatprep.subr.mxu0 0.0
    %561 = vmatpush2.msra.mxu0 %v473
    %562 = vmatprep.subr.mxu0 0.0
    %563 = vmatpush2.msra.mxu0 %v472
    %564 = vmatprep.subr.mxu0 0.0
    %565 = vmatpush2.msra.mxu0 %v471
    %566 = vmatprep.subr.mxu0 0.0
    %567 = vmatpush2.msra.mxu0 %v470
    %568 = vmatprep.subr.mxu0 0.0
    %569 = vmatpush2.msra.mxu0 %v469
    %570 = vmatprep.subr.mxu0 0.0
    %571 = vmatpush2.msra.mxu0 %v468
    %572 = vmatprep.mubr.f32.mxu0 %v404
    %573 = vmatmul.mubr.f32.gmra.mxu0 %v401
    %v574 = vpop.f32.mrf.mxu0
    %v575 = vadd.f32 %v492, %v574
    %v576 = vpop.f32.mrf.mxu0
    %577 = vmatprep.mubr.f32.mxu0 %v411
    %578 = vmatmul.mubr.f32.gmra.mxu0 %v409
    %v579 = vpop.f32.mrf.mxu0
    %v580 = vadd.f32 %v493, %v579
    %v581 = vpop.f32.mrf.mxu0
    %582 = vmatprep.mubr.f32.mxu0 %v417
    %583 = vmatmul.mubr.f32.gmra.mxu0 %v415
    %v584 = vpop.f32.mrf.mxu0
    %v585 = vadd.f32 %v494, %v584
    %v586 = vpop.f32.mrf.mxu0
    %587 = vmatprep.mubr.f32.mxu0 %v435
    %588 = vmatmul.mubr.f32.gmra.mxu0 %v433
    %v589 = vpop.f32.mrf.mxu0
    %v590 = vadd.f32 %v495, %v589
    %v591 = vpop.f32.mrf.mxu0
    %592 = vmatprep.mubr.f32.mxu0 %v442
    %593 = vmatmul.mubr.f32.gmra.mxu0 %v440
    %v594 = vpop.f32.mrf.mxu0
    %v595 = vadd.f32 %v496, %v594
    %v596 = vpop.f32.mrf.mxu0
    %597 = vmatprep.mubr.f32.mxu0 %v445
    %598 = vmatmul.mubr.f32.gmra.mxu0 %v444
    %v599 = vpop.f32.mrf.mxu0
    %v600 = vadd.f32 %v497, %v599
    %v601 = vpop.f32.mrf.mxu0
    %602 = vdwg.mxu0
    %603 = vmatprep.subr.mxu0 0.0
    %604 = vmatpush1.msra.mxu0 0.0
    %605 = vmatprep.subr.mxu0 0.0
    %606 = vmatpush1.msra.mxu0 0.0
    %607 = vmatprep.subr.mxu0 0.0
    %608 = vmatpush1.msra.mxu0 0.0
    %609 = vmatprep.subr.mxu0 0.0
    %610 = vmatpush1.msra.mxu0 0.0
    %611 = vmatprep.subr.mxu0 0.0
    %612 = vmatpush1.msra.mxu0 0.0
    %613 = vmatprep.subr.mxu0 0.0
    %614 = vmatpush1.msra.mxu0 0.0
    %615 = vmatprep.subr.mxu0 0.0
    %616 = vmatpush1.msra.mxu0 0.0
    %617 = vmatprep.subr.mxu0 0.0
    %618 = vmatpush1.msra.mxu0 0.0
    %619 = vmatprep.subr.mxu0 0.0
    %620 = vmatpush1.msra.mxu0 %v491
    %621 = vmatprep.subr.mxu0 0.0
    %622 = vmatpush1.msra.mxu0 %v490
    %623 = vmatprep.subr.mxu0 0.0
    %624 = vmatpush1.msra.mxu0 %v489
    %625 = vmatprep.subr.mxu0 0.0
    %626 = vmatpush1.msra.mxu0 %v488
    %627 = vmatprep.subr.mxu0 0.0
    %628 = vmatpush1.msra.mxu0 %v487
    %629 = vmatprep.subr.mxu0 0.0
    %630 = vmatpush1.msra.mxu0 %v486
    %631 = vmatprep.subr.mxu0 0.0
    %632 = vmatpush1.msra.mxu0 %v485
    %633 = vmatprep.subr.mxu0 0.0
    %634 = vmatpush1.msra.mxu0 %v484
    %635 = vmatprep.subr.mxu0 0.0
    %636 = vmatpush2.msra.mxu0 0.0
    %637 = vmatprep.subr.mxu0 0.0
    %638 = vmatpush2.msra.mxu0 0.0
    %639 = vmatprep.subr.mxu0 0.0
    %640 = vmatpush2.msra.mxu0 0.0
    %641 = vmatprep.subr.mxu0 0.0
    %642 = vmatpush2.msra.mxu0 0.0
    %643 = vmatprep.subr.mxu0 0.0
    %644 = vmatpush2.msra.mxu0 0.0
    %645 = vmatprep.subr.mxu0 0.0
    %646 = vmatpush2.msra.mxu0 0.0
    %647 = vmatprep.subr.mxu0 0.0
    %648 = vmatpush2.msra.mxu0 0.0
    %649 = vmatprep.subr.mxu0 0.0
    %650 = vmatpush2.msra.mxu0 0.0
    %651 = vmatprep.subr.mxu0 0.0
    %652 = vmatpush2.msra.mxu0 0.0
    %653 = vmatprep.subr.mxu0 0.0
    %654 = vmatpush2.msra.mxu0 0.0
    %655 = vmatprep.subr.mxu0 0.0
    %656 = vmatpush2.msra.mxu0 0.0
    %657 = vmatprep.subr.mxu0 0.0
    %658 = vmatpush2.msra.mxu0 0.0
    %659 = vmatprep.subr.mxu0 0.0
    %660 = vmatpush2.msra.mxu0 0.0
    %661 = vmatprep.subr.mxu0 0.0
    %662 = vmatpush2.msra.mxu0 0.0
    %663 = vmatprep.subr.mxu0 0.0
    %664 = vmatpush2.msra.mxu0 0.0
    %665 = vmatprep.subr.mxu0 0.0
    %666 = vmatpush2.msra.mxu0 0.0
    %667 = vmatprep.mubr.f32.mxu0 0.0
    %668 = vmatmul.mubr.f32.gmra.mxu0 %v498
    %v669 = vpop.f32.mrf.mxu0
    %v670 = vadd.f32 %v575, %v669
    %v671 = vpop.f32.mrf.mxu0
    %672 = vmatprep.mubr.f32.mxu0 0.0
    %673 = vmatmul.mubr.f32.gmra.mxu0 %v500
    %v674 = vpop.f32.mrf.mxu0
    %v675 = vadd.f32 %v580, %v674
    %v676 = vpop.f32.mrf.mxu0
    %677 = vmatprep.mubr.f32.mxu0 0.0
    %678 = vmatmul.mubr.f32.gmra.mxu0 %v502
    %v679 = vpop.f32.mrf.mxu0
    %v680 = vadd.f32 %v585, %v679
    %v681 = vpop.f32.mrf.mxu0
    %682 = vmatprep.mubr.f32.mxu0 0.0
    %683 = vmatmul.mubr.f32.gmra.mxu0 %v504
    %v684 = vpop.f32.mrf.mxu0
    %v685 = vadd.f32 %v590, %v684
    %v686 = vpop.f32.mrf.mxu0
    %687 = vmatprep.mubr.f32.mxu0 0.0
    %688 = vmatmul.mubr.f32.gmra.mxu0 %v506
    %v689 = vpop.f32.mrf.mxu0
    %v690 = vadd.f32 %v595, %v689
    %v691 = vpop.f32.mrf.mxu0
    %692 = vmatprep.mubr.f32.mxu0 0.0
    %693 = vmatmul.mubr.f32.gmra.mxu0 %v502
    %v694 = vpop.f32.mrf.mxu0
    %v695 = vadd.f32 %v600, %v694
    %v696 = vpop.f32.mrf.mxu0
    %697 = vdwg.mxu0
    %v698 = vmax.f32 %v670, %v675
    %v699 = vmax.f32 %v698, %v680
    %v700 = vrot.slane %v699, 4
    %v701 = vmax.f32 %v699, %v700
    %v702 = vrot.slane %v701, 2
    %v703 = vmax.f32 %v701, %v702
    %v704 = vrot.slane %v703, 1
    %v705 = vmax.f32 %v703, %v704
    %v706 = vmax.f32 %v685, %v690
    %v707 = vmax.f32 %v706, %v695
    %v708 = vrot.slane %v707, 4
    %v709 = vmax.f32 %v707, %v708
    %v710 = vrot.slane %v709, 2
    %v711 = vmax.f32 %v709, %v710
    %v712 = vrot.slane %v711, 1
    %v713 = vmax.f32 %v711, %v712
    %v714 = vsel %vm259, %v705, %v713
    %v715 = vld [vmem:[%s3] sm:$0x1]
    %v717 = vlaneseq
    %v718 = vshrl.u32 %v717, 7
    %v719 = vsub.s32 0, %v718
    %v720 = vrot.slane %v715, %v719
    %v722 = vadd.f32 %v714, %v720
    %v723 = vmax.f32 %v722, 0.0
    %v724 = vmin.f32 %v723, 6.0
    %v725 = vld [vmem:[#allocation5] sm:$0xff]
    %v726 = vld [vmem:[#allocation5 + $0x8] sm:$0xff]
    %v727 = vld [vmem:[#allocation5 + $0x10] sm:$0xff]
    %v728 = vld [vmem:[#allocation5 + $0x18] sm:$0xff]
    %v729 = vld [vmem:[#allocation5 + $0x20] sm:$0xff]
    %v730 = vld [vmem:[#allocation5 + $0x28] sm:$0xff]
    %v731 = vld [vmem:[#allocation5 + $0x30] sm:$0xff]
    %v732 = vld [vmem:[#allocation5 + $0x38] sm:$0xff]
    %v733 = vld [vmem:[#allocation5 + $0x40] sm:$0xff]
    %v734 = vld [vmem:[#allocation5 + $0x48] sm:$0xff]
    %v735 = vld [vmem:[#allocation5 + $0x50] sm:$0xff]
    %v736 = vld [vmem:[#allocation5 + $0x58] sm:$0xff]
    %v737 = vld [vmem:[#allocation5 + $0x60] sm:$0xff]
    %v738 = vld [vmem:[#allocation5 + $0x68] sm:$0xff]
    %v739 = vld [vmem:[#allocation5 + $0x70] sm:$0xff]
    %v740 = vld [vmem:[#allocation5 + $0x78] sm:$0xff]
    %v741 = vld [vmem:[%s6] sm:$0x1]
    %v743 = vlaneseq
    %v744 = vshrl.u32 %v743, 7
    %v745 = vsub.s32 0, %v744
    %v746 = vrot.slane %v741, %v745
    %748 = vmatprep.subr.mxu0 0.0
    %749 = vmatpush1.msra.mxu0 %v740
    %750 = vmatprep.subr.mxu0 0.0
    %751 = vmatpush1.msra.mxu0 %v739
    %752 = vmatprep.subr.mxu0 0.0
    %753 = vmatpush1.msra.mxu0 %v738
    %754 = vmatprep.subr.mxu0 0.0
    %755 = vmatpush1.msra.mxu0 %v737
    %756 = vmatprep.subr.mxu0 0.0
    %757 = vmatpush1.msra.mxu0 %v736
    %758 = vmatprep.subr.mxu0 0.0
    %759 = vmatpush1.msra.mxu0 %v735
    %760 = vmatprep.subr.mxu0 0.0
    %761 = vmatpush1.msra.mxu0 %v734
    %762 = vmatprep.subr.mxu0 0.0
    %763 = vmatpush1.msra.mxu0 %v733
    %764 = vmatprep.subr.mxu0 0.0
    %765 = vmatpush1.msra.mxu0 %v732
    %766 = vmatprep.subr.mxu0 0.0
    %767 = vmatpush1.msra.mxu0 %v731
    %768 = vmatprep.subr.mxu0 0.0
    %769 = vmatpush1.msra.mxu0 %v730
    %770 = vmatprep.subr.mxu0 0.0
    %771 = vmatpush1.msra.mxu0 %v729
    %772 = vmatprep.subr.mxu0 0.0
    %773 = vmatpush1.msra.mxu0 %v728
    %774 = vmatprep.subr.mxu0 0.0
    %775 = vmatpush1.msra.mxu0 %v727
    %776 = vmatprep.subr.mxu0 0.0
    %777 = vmatpush1.msra.mxu0 %v726
    %778 = vmatprep.subr.mxu0 0.0
    %779 = vmatpush1.msra.mxu0 %v725
    %780 = vmatprep.subr.mxu0 0.0
    %781 = vmatpush2.msra.mxu0 0.0
    %782 = vmatprep.subr.mxu0 0.0
    %783 = vmatpush2.msra.mxu0 0.0
    %784 = vmatprep.subr.mxu0 0.0
    %785 = vmatpush2.msra.mxu0 0.0
    %786 = vmatprep.subr.mxu0 0.0
    %787 = vmatpush2.msra.mxu0 0.0
    %788 = vmatprep.subr.mxu0 0.0
    %789 = vmatpush2.msra.mxu0 0.0
    %790 = vmatprep.subr.mxu0 0.0
    %791 = vmatpush2.msra.mxu0 0.0
    %792 = vmatprep.subr.mxu0 0.0
    %793 = vmatpush2.msra.mxu0 0.0
    %794 = vmatprep.subr.mxu0 0.0
    %795 = vmatpush2.msra.mxu0 0.0
    %796 = vmatprep.subr.mxu0 0.0
    %797 = vmatpush2.msra.mxu0 0.0
    %798 = vmatprep.subr.mxu0 0.0
    %799 = vmatpush2.msra.mxu0 0.0
    %800 = vmatprep.subr.mxu0 0.0
    %801 = vmatpush2.msra.mxu0 0.0
    %802 = vmatprep.subr.mxu0 0.0
    %803 = vmatpush2.msra.mxu0 0.0
    %804 = vmatprep.subr.mxu0 0.0
    %805 = vmatpush2.msra.mxu0 0.0
    %806 = vmatprep.subr.mxu0 0.0
    %807 = vmatpush2.msra.mxu0 0.0
    %808 = vmatprep.subr.mxu0 0.0
    %809 = vmatpush2.msra.mxu0 0.0
    %810 = vmatprep.subr.mxu0 0.0
    %811 = vmatpush2.msra.mxu0 0.0
    %812 = vmatprep.mubr.f32.mxu0 0.0
    %813 = vmatmul.mubr.f32.gmra.mxu0 %v724
    %v814 = vpop.f32.mrf.mxu0
    %v815 = vadd.f32 %v746, %v814
    %v816 = vpop.f32.mrf.mxu0
    %817 = vdwg.mxu0
    %818 = vst [vmem:[#allocation7] sm:$0x3] %v815
    // Predicated region
    $region38: #{cnn_forward.1} parent=1 // pred_check
      _
    $region39: #{cnn_forward.1} parent=1 // pred_check_branch
      %820 = sbr.rel (0) target = $region41
    $region40: #{cnn_forward.1} parent=1 // pred_region
      %s822 = ssub.s32 32, 32
      %823 = vsyncadd [#allocation4], %s822
      %s825 = sshll.u32 [#allocation7], 4
      %s826 = int_to_ptr.vmem [resolvable:$true] %s825
      %828 = dma.vmem_to_hbm [thread:$0]  %s826, 32, %s7, [#allocation4]
    $region41: #{cnn_forward.1} parent=1 // pred_fallthru
      _
    // Predicated region
    $region42: #{cnn_forward.1} parent=1 // pred_check
      _
    $region43: #{cnn_forward.1} parent=1 // pred_check_branch
      %830 = sbr.rel (0) target = $region45
    $region44: #{cnn_forward.1} parent=1 // pred_region
      %831 = dma.done [#allocation4], 32
    $region45: #{cnn_forward.1} parent=1 // pred_fallthru
      _
    %832 = vsyncpa [#allocation3], 1
    %833 = vsyncpa [#allocation6], 1
    %834 = vsyncpa [#allocation4], 1

</llo_original>
